<compile_context>
chip_gen: v6e
topology: v6e:2x2x1
jax: 0.10.0
libtpu: 0.0.40
codegen_flags: <defaults>
</compile_context>

<pallas_src>
import functools

import jax
import jax.numpy as jnp
import numpy as np
from jax.experimental import pallas as pl
from jax.experimental.pallas import tpu as pltpu

EPS = 1e-5  # PyTorch InstanceNorm2d default eps


def residual_block_kernel(x_ref, mask_ref, w1_ref, g1_ref, b1_ref,
                          w2_ref, g2_ref, b2_ref, o_ref, patch_ref, *, H, W):
    """One batch sample per grid step.

    x_ref     : (1, C, H*W)   input sample, spatial flattened into lanes
    mask_ref  : (9, H*W)      f32 border-validity mask per 3x3 tap (precomputed)
    w*_ref    : (C, 9*C)      conv weights, columns ordered (ky, kx, c_in)
    g*/b*_ref : (C, 1)        instance-norm affine params
    o_ref     : (1, C, H*W)   output sample
    patch_ref : (9*C, H*W)    VMEM scratch: im2col patch matrix
    """
    C = x_ref.shape[1]
    HW = H * W

    x = x_ref[0]                                             # (C, HW) f32

    def conv3x3(act, w_ref):
        # im2col: patch[tap*C + c_in, p] = act[c_in, p + dy*W + dx] (0 outside image).
        # Spatial shift = lane rotation (XLU) + border mask, then one MXU matmul.
        for ky in range(3):
            for kx in range(3):
                tap = ky * 3 + kx
                dy, dx = ky - 1, kx - 1
                delta = dy * W + dx
                shifted = act if delta == 0 else pltpu.roll(
                    act, shift=(-delta) % HW, axis=1)
                if dy == 0 and dx == 0:                      # center tap: always valid
                    patch_ref[tap * C:(tap + 1) * C, :] = shifted
                else:
                    patch_ref[tap * C:(tap + 1) * C, :] = (
                        shifted * mask_ref[tap:tap + 1, :])
        # (C, 9C) @ (9C, HW) -> (C, HW), lane-dense output.
        return jnp.dot(w_ref[...], patch_ref[...],
                       preferred_element_type=jnp.float32)

    def instance_norm(y, g_ref, b_ref):
        # Per-channel mean/var over spatial positions (biased variance, as PyTorch).
        mean = jnp.mean(y, axis=1, keepdims=True)            # (C, 1)
        centered = y - mean
        var = jnp.mean(centered * centered, axis=1, keepdims=True)
        return centered * jax.lax.rsqrt(var + EPS) * g_ref[...] + b_ref[...]

    h = conv3x3(x, w1_ref)
    h = instance_norm(h, g1_ref, b1_ref)
    h = jnp.maximum(h, 0.0)
    h = conv3x3(h, w2_ref)
    h = instance_norm(h, g2_ref, b2_ref)

    o_ref[0] = x + h                                         # residual add


def _make_tap_masks(H, W):
    """(9, H*W) f32: 1.0 where the shifted source pixel lies inside the image."""
    hh, ww = np.meshgrid(np.arange(H), np.arange(W), indexing="ij")
    hh = hh.reshape(1, H * W)
    ww = ww.reshape(1, H * W)
    rows = []
    for ky in range(3):
        for kx in range(3):
            dy, dx = ky - 1, kx - 1
            valid = ((hh + dy >= 0) & (hh + dy < H)
                     & (ww + dx >= 0) & (ww + dx < W))
            rows.append(valid.astype(np.float32))
    return jnp.asarray(np.concatenate(rows, axis=0))


def residual_block(x_nchw, w1, g1, b1, w2, g2, b2):
    """PyTorch-compatible wrapper: x (N, C, H, W), conv weights (O, I, 3, 3)."""
    N, C, H, W = x_nchw.shape
    HW = H * W

    # NCHW with spatial flattened into the lane axis -- no transpose needed.
    x = x_nchw.reshape(N, C, HW)
    # (O, I, 3, 3) -> (O, 3, 3, I) -> (O, 9*I): column order = (ky, kx, c_in),
    # matching the im2col patch row order in the kernel.
    w1m = jnp.transpose(w1, (0, 2, 3, 1)).reshape(C, 9 * C)
    w2m = jnp.transpose(w2, (0, 2, 3, 1)).reshape(C, 9 * C)
    g1r, b1r = g1.reshape(C, 1), b1.reshape(C, 1)
    g2r, b2r = g2.reshape(C, 1), b2.reshape(C, 1)
    masks = _make_tap_masks(H, W)                            # (9, HW) f32

    kernel = functools.partial(residual_block_kernel, H=H, W=W)

    out_flat = pl.pallas_call(
        kernel,
        out_shape=jax.ShapeDtypeStruct((N, C, HW), jnp.float32),
        grid_spec=pltpu.PrefetchScalarGridSpec(
            num_scalar_prefetch=0,
            grid=(N,),
            in_specs=[
                pl.BlockSpec((1, C, HW), lambda n: (n, 0, 0)),   # x (per sample)
                pl.BlockSpec((9, HW), lambda n: (0, 0)),         # tap masks (resident)
                pl.BlockSpec((C, 9 * C), lambda n: (0, 0)),      # w1 (resident)
                pl.BlockSpec((C, 1), lambda n: (0, 0)),          # gamma1
                pl.BlockSpec((C, 1), lambda n: (0, 0)),          # beta1
                pl.BlockSpec((C, 9 * C), lambda n: (0, 0)),      # w2
                pl.BlockSpec((C, 1), lambda n: (0, 0)),          # gamma2
                pl.BlockSpec((C, 1), lambda n: (0, 0)),          # beta2
            ],
            out_specs=pl.BlockSpec((1, C, HW), lambda n: (n, 0, 0)),
            scratch_shapes=[pltpu.VMEM((9 * C, HW), jnp.float32)],
        ),
        # Batch axis is data-parallel: both TensorCores busy on v7x; plain serial
        # loop on v5e/v6e.
        compiler_params=pltpu.CompilerParams(dimension_semantics=("parallel",)),
    )(x, masks, w1m, g1r, b1r, w2m, g2r, b2r)

    return out_flat.reshape(N, C, H, W)


def reference(x, w1, g1, b1, w2, g2, b2):
    """Pure-JAX reference with identical semantics (NCHW)."""
    def conv(y, w):
        return jax.lax.conv_general_dilated(
            y, w, window_strides=(1, 1), padding="SAME",
            dimension_numbers=("NCHW", "OIHW", "NCHW"))

    def inorm(y, g, b):
        mean = y.mean(axis=(2, 3), keepdims=True)
        var = ((y - mean) ** 2).mean(axis=(2, 3), keepdims=True)
        yhat = (y - mean) * jax.lax.rsqrt(var + EPS)
        return yhat * g.reshape(1, -1, 1, 1) + b.reshape(1, -1, 1, 1)

    h = jnp.maximum(inorm(conv(x, w1), g1, b1), 0.0)
    h = inorm(conv(h, w2), g2, b2)
    return x + h


if __name__ == "__main__":
    N, C, H, W = 2, 4, 16, 16  # dim_in == dim_out == 4 (required for the residual add)
    key = jax.random.PRNGKey(0)
    kx, k1, k2, kg1, kb1, kg2, kb2 = jax.random.split(key, 7)

    x = jax.random.normal(kx, (N, C, H, W), dtype=jnp.float32)
    # Conv2d(dim_in, dim_out, 3, 1, 1, bias=False): weight (O, I, 3, 3)
    w1 = jax.random.normal(k1, (C, C, 3, 3), dtype=jnp.float32) * 0.1
    w2 = jax.random.normal(k2, (C, C, 3, 3), dtype=jnp.float32) * 0.1
    # InstanceNorm2d(affine=True): weight/bias (C,) — random but deterministic
    g1 = 1.0 + 0.1 * jax.random.normal(kg1, (C,), dtype=jnp.float32)
    b1 = 0.1 * jax.random.normal(kb1, (C,), dtype=jnp.float32)
    g2 = 1.0 + 0.1 * jax.random.normal(kg2, (C,), dtype=jnp.float32)
    b2 = 0.1 * jax.random.normal(kb2, (C,), dtype=jnp.float32)

    out = jax.block_until_ready(residual_block(x, w1, g1, b1, w2, g2, b2))
    ref = jax.block_until_ready(reference(x, w1, g1, b1, w2, g2, b2))

    assert out.shape == (N, C, H, W)
    np.testing.assert_allclose(np.asarray(out), np.asarray(ref), rtol=1e-4, atol=1e-4)
    print("KERNEL_OK")
</pallas_src>

<mosaic_0001>
module attributes {stable_mosaic.version = 11 : i64} {
  func.func @residual_block_kernel(%arg0: i32, %arg1: memref<1x4x256xf32, #tpu.memory_space<vmem>>, %arg2: memref<9x256xf32, #tpu.memory_space<vmem>>, %arg3: memref<4x36xf32, #tpu.memory_space<vmem>>, %arg4: memref<4x1xf32, #tpu.memory_space<vmem>>, %arg5: memref<4x1xf32, #tpu.memory_space<vmem>>, %arg6: memref<4x36xf32, #tpu.memory_space<vmem>>, %arg7: memref<4x1xf32, #tpu.memory_space<vmem>>, %arg8: memref<4x1xf32, #tpu.memory_space<vmem>>, %arg9: memref<1x4x256xf32, #tpu.memory_space<vmem>>, %arg10: memref<36x256xf32, #tpu.memory_space<vmem>>) attributes {dimension_semantics = [#tpu.dimension_semantics<parallel>], iteration_bounds = array<i64: 2>, scalar_prefetch = 0 : i64, scratch_operands = 1 : i64, tpu.core_type = #tpu.core_type<tc>, window_params = [{transform_indices = @transform_0, window_bounds = array<i64: 1, 4, 256>}, {pipeline_mode = #tpu.pipeline_mode<synchronous>, transform_indices = @transform_1, window_bounds = array<i64: 9, 256>}, {pipeline_mode = #tpu.pipeline_mode<synchronous>, transform_indices = @transform_2, window_bounds = array<i64: 4, 36>}, {pipeline_mode = #tpu.pipeline_mode<synchronous>, transform_indices = @transform_3, window_bounds = array<i64: 4, 1>}, {pipeline_mode = #tpu.pipeline_mode<synchronous>, transform_indices = @transform_4, window_bounds = array<i64: 4, 1>}, {pipeline_mode = #tpu.pipeline_mode<synchronous>, transform_indices = @transform_5, window_bounds = array<i64: 4, 36>}, {pipeline_mode = #tpu.pipeline_mode<synchronous>, transform_indices = @transform_6, window_bounds = array<i64: 4, 1>}, {pipeline_mode = #tpu.pipeline_mode<synchronous>, transform_indices = @transform_7, window_bounds = array<i64: 4, 1>}, {transform_indices = @transform_8, window_bounds = array<i64: 1, 4, 256>}]} {
    %c0 = arith.constant 0 : index
    %c0_0 = arith.constant 0 : index
    %c0_1 = arith.constant 0 : index
    %0 = vector.load %arg1[%c0, %c0_0, %c0_1] : memref<1x4x256xf32, #tpu.memory_space<vmem>>, vector<1x4x256xf32>
    %1 = vector.shape_cast %0 : vector<1x4x256xf32> to vector<4x256xf32>
    %c17_i32 = arith.constant 17 : i32
    %2 = tpu.dynamic_rotate %1 by %c17_i32 dim 1 : vector<4x256xf32>, i32 -> vector<4x256xf32>
    %c0_2 = arith.constant 0 : index
    %c0_3 = arith.constant 0 : index
    %3 = vector.load %arg2[%c0_2, %c0_3] : memref<9x256xf32, #tpu.memory_space<vmem>>, vector<1x256xf32>
    %4 = vector.broadcast %3 : vector<1x256xf32> to vector<4x256xf32>
    %5 = arith.mulf %2, %4 : vector<4x256xf32>
    %c0_4 = arith.constant 0 : index
    %c0_5 = arith.constant 0 : index
    %6 = vector.load %arg10[%c0_4, %c0_5] : memref<36x256xf32, #tpu.memory_space<vmem>>, vector<4x256xf32>
    tpu.vector_store %arg10[%c0_4, %c0_5], %5 {strides = array<i32>} : memref<36x256xf32, #tpu.memory_space<vmem>>, vector<4x256xf32>,
    %c16_i32 = arith.constant 16 : i32
    %7 = tpu.dynamic_rotate %1 by %c16_i32 dim 1 : vector<4x256xf32>, i32 -> vector<4x256xf32>
    %c1 = arith.constant 1 : index
    %c0_6 = arith.constant 0 : index
    %8 = vector.load %arg2[%c1, %c0_6] : memref<9x256xf32, #tpu.memory_space<vmem>>, vector<1x256xf32>
    %9 = vector.broadcast %8 : vector<1x256xf32> to vector<4x256xf32>
    %10 = arith.mulf %7, %9 : vector<4x256xf32>
    %c4 = arith.constant 4 : index
    %c0_7 = arith.constant 0 : index
    %11 = vector.load %arg10[%c4, %c0_7] : memref<36x256xf32, #tpu.memory_space<vmem>>, vector<4x256xf32>
    tpu.vector_store %arg10[%c4, %c0_7], %10 {strides = array<i32>} : memref<36x256xf32, #tpu.memory_space<vmem>>, vector<4x256xf32>,
    %c15_i32 = arith.constant 15 : i32
    %12 = tpu.dynamic_rotate %1 by %c15_i32 dim 1 : vector<4x256xf32>, i32 -> vector<4x256xf32>
    %c2 = arith.constant 2 : index
    %c0_8 = arith.constant 0 : index
    %13 = vector.load %arg2[%c2, %c0_8] : memref<9x256xf32, #tpu.memory_space<vmem>>, vector<1x256xf32>
    %14 = vector.broadcast %13 : vector<1x256xf32> to vector<4x256xf32>
    %15 = arith.mulf %12, %14 : vector<4x256xf32>
    %c8 = arith.constant 8 : index
    %c0_9 = arith.constant 0 : index
    %16 = vector.load %arg10[%c8, %c0_9] : memref<36x256xf32, #tpu.memory_space<vmem>>, vector<4x256xf32>
    tpu.vector_store %arg10[%c8, %c0_9], %15 {strides = array<i32>} : memref<36x256xf32, #tpu.memory_space<vmem>>, vector<4x256xf32>,
    %c1_i32 = arith.constant 1 : i32
    %17 = tpu.dynamic_rotate %1 by %c1_i32 dim 1 : vector<4x256xf32>, i32 -> vector<4x256xf32>
    %c3 = arith.constant 3 : index
    %c0_10 = arith.constant 0 : index
    %18 = vector.load %arg2[%c3, %c0_10] : memref<9x256xf32, #tpu.memory_space<vmem>>, vector<1x256xf32>
    %19 = vector.broadcast %18 : vector<1x256xf32> to vector<4x256xf32>
    %20 = arith.mulf %17, %19 : vector<4x256xf32>
    %c12 = arith.constant 12 : index
    %c0_11 = arith.constant 0 : index
    %21 = vector.load %arg10[%c12, %c0_11] : memref<36x256xf32, #tpu.memory_space<vmem>>, vector<4x256xf32>
    tpu.vector_store %arg10[%c12, %c0_11], %20 {strides = array<i32>} : memref<36x256xf32, #tpu.memory_space<vmem>>, vector<4x256xf32>,
    %c16 = arith.constant 16 : index
    %c0_12 = arith.constant 0 : index
    %22 = vector.load %arg10[%c16, %c0_12] : memref<36x256xf32, #tpu.memory_space<vmem>>, vector<4x256xf32>
    tpu.vector_store %arg10[%c16, %c0_12], %1 {strides = array<i32>} : memref<36x256xf32, #tpu.memory_space<vmem>>, vector<4x256xf32>,
    %c255_i32 = arith.constant 255 : i32
    %23 = tpu.dynamic_rotate %1 by %c255_i32 dim 1 : vector<4x256xf32>, i32 -> vector<4x256xf32>
    %c5 = arith.constant 5 : index
    %c0_13 = arith.constant 0 : index
    %24 = vector.load %arg2[%c5, %c0_13] : memref<9x256xf32, #tpu.memory_space<vmem>>, vector<1x256xf32>
    %25 = vector.broadcast %24 : vector<1x256xf32> to vector<4x256xf32>
    %26 = arith.mulf %23, %25 : vector<4x256xf32>
    %c20 = arith.constant 20 : index
    %c0_14 = arith.constant 0 : index
    %27 = vector.load %arg10[%c20, %c0_14] : memref<36x256xf32, #tpu.memory_space<vmem>>, vector<4x256xf32>
    tpu.vector_store %arg10[%c20, %c0_14], %26 {strides = array<i32>} : memref<36x256xf32, #tpu.memory_space<vmem>>, vector<4x256xf32>,
    %c241_i32 = arith.constant 241 : i32
    %28 = tpu.dynamic_rotate %1 by %c241_i32 dim 1 : vector<4x256xf32>, i32 -> vector<4x256xf32>
    %c6 = arith.constant 6 : index
    %c0_15 = arith.constant 0 : index
    %29 = vector.load %arg2[%c6, %c0_15] : memref<9x256xf32, #tpu.memory_space<vmem>>, vector<1x256xf32>
    %30 = vector.broadcast %29 : vector<1x256xf32> to vector<4x256xf32>
    %31 = arith.mulf %28, %30 : vector<4x256xf32>
    %c24 = arith.constant 24 : index
    %c0_16 = arith.constant 0 : index
    %32 = vector.load %arg10[%c24, %c0_16] : memref<36x256xf32, #tpu.memory_space<vmem>>, vector<4x256xf32>
    tpu.vector_store %arg10[%c24, %c0_16], %31 {strides = array<i32>} : memref<36x256xf32, #tpu.memory_space<vmem>>, vector<4x256xf32>,
    %c240_i32 = arith.constant 240 : i32
    %33 = tpu.dynamic_rotate %1 by %c240_i32 dim 1 : vector<4x256xf32>, i32 -> vector<4x256xf32>
    %c7 = arith.constant 7 : index
    %c0_17 = arith.constant 0 : index
    %34 = vector.load %arg2[%c7, %c0_17] : memref<9x256xf32, #tpu.memory_space<vmem>>, vector<1x256xf32>
    %35 = vector.broadcast %34 : vector<1x256xf32> to vector<4x256xf32>
    %36 = arith.mulf %33, %35 : vector<4x256xf32>
    %c28 = arith.constant 28 : index
    %c0_18 = arith.constant 0 : index
    %37 = vector.load %arg10[%c28, %c0_18] : memref<36x256xf32, #tpu.memory_space<vmem>>, vector<4x256xf32>
    tpu.vector_store %arg10[%c28, %c0_18], %36 {strides = array<i32>} : memref<36x256xf32, #tpu.memory_space<vmem>>, vector<4x256xf32>,
    %c239_i32 = arith.constant 239 : i32
    %38 = tpu.dynamic_rotate %1 by %c239_i32 dim 1 : vector<4x256xf32>, i32 -> vector<4x256xf32>
    %c8_19 = arith.constant 8 : index
    %c0_20 = arith.constant 0 : index
    %39 = vector.load %arg2[%c8_19, %c0_20] : memref<9x256xf32, #tpu.memory_space<vmem>>, vector<1x256xf32>
    %40 = vector.broadcast %39 : vector<1x256xf32> to vector<4x256xf32>
    %41 = arith.mulf %38, %40 : vector<4x256xf32>
    %c32 = arith.constant 32 : index
    %c0_21 = arith.constant 0 : index
    %42 = vector.load %arg10[%c32, %c0_21] : memref<36x256xf32, #tpu.memory_space<vmem>>, vector<4x256xf32>
    tpu.vector_store %arg10[%c32, %c0_21], %41 {strides = array<i32>} : memref<36x256xf32, #tpu.memory_space<vmem>>, vector<4x256xf32>,
    %c0_22 = arith.constant 0 : index
    %c0_23 = arith.constant 0 : index
    %43 = vector.load %arg3[%c0_22, %c0_23] : memref<4x36xf32, #tpu.memory_space<vmem>>, vector<4x36xf32>
    %c0_24 = arith.constant 0 : index
    %c0_25 = arith.constant 0 : index
    %44 = vector.load %arg10[%c0_24, %c0_25] : memref<36x256xf32, #tpu.memory_space<vmem>>, vector<36x256xf32>
    %cst = arith.constant dense<0.000000e+00> : vector<4x256xf32>
    %45 = tpu.matmul %43, %44, %cst {dimension_numbers = #tpu.dot_dimension_numbers<[1], [0], [0], [1], [0, 0, 1, 1], [], []>} : vector<4x36xf32>, vector<36x256xf32>, vector<4x256xf32> -> vector<4x256xf32>
    %cst_26 = arith.constant dense<0.000000e+00> : vector<4xf32>
    %46 = vector.multi_reduction <add>, %45, %cst_26 [1] : vector<4x256xf32> to vector<4xf32>
    %47 = vector.shape_cast %46 : vector<4xf32> to vector<4x1xf32>
    %cst_27 = arith.constant 2.560000e+02 : f32
    %48 = vector.broadcast %cst_27 : f32 to vector<4x1xf32>
    %49 = arith.divf %47, %48 : vector<4x1xf32>
    %50 = vector.broadcast %49 : vector<4x1xf32> to vector<4x256xf32>
    %51 = arith.subf %45, %50 : vector<4x256xf32>
    %52 = arith.mulf %51, %51 : vector<4x256xf32>
    %cst_28 = arith.constant dense<0.000000e+00> : vector<4xf32>
    %53 = vector.multi_reduction <add>, %52, %cst_28 [1] : vector<4x256xf32> to vector<4xf32>
    %54 = vector.shape_cast %53 : vector<4xf32> to vector<4x1xf32>
    %cst_29 = arith.constant 2.560000e+02 : f32
    %55 = vector.broadcast %cst_29 : f32 to vector<4x1xf32>
    %56 = arith.divf %54, %55 : vector<4x1xf32>
    %cst_30 = arith.constant 9.99999974E-6 : f32
    %57 = vector.broadcast %cst_30 : f32 to vector<4x1xf32>
    %58 = arith.addf %56, %57 : vector<4x1xf32>
    %59 = math.rsqrt %58 : vector<4x1xf32>
    %60 = vector.broadcast %59 : vector<4x1xf32> to vector<4x256xf32>
    %61 = arith.mulf %51, %60 : vector<4x256xf32>
    %c0_31 = arith.constant 0 : index
    %c0_32 = arith.constant 0 : index
    %62 = vector.load %arg4[%c0_31, %c0_32] : memref<4x1xf32, #tpu.memory_space<vmem>>, vector<4x1xf32>
    %63 = vector.broadcast %62 : vector<4x1xf32> to vector<4x256xf32>
    %64 = arith.mulf %61, %63 : vector<4x256xf32>
    %c0_33 = arith.constant 0 : index
    %c0_34 = arith.constant 0 : index
    %65 = vector.load %arg5[%c0_33, %c0_34] : memref<4x1xf32, #tpu.memory_space<vmem>>, vector<4x1xf32>
    %66 = vector.broadcast %65 : vector<4x1xf32> to vector<4x256xf32>
    %67 = arith.addf %64, %66 : vector<4x256xf32>
    %cst_35 = arith.constant 0.000000e+00 : f32
    %68 = vector.broadcast %cst_35 : f32 to vector<4x256xf32>
    %69 = arith.maximumf %67, %68 : vector<4x256xf32>
    %c17_i32_36 = arith.constant 17 : i32
    %70 = tpu.dynamic_rotate %69 by %c17_i32_36 dim 1 : vector<4x256xf32>, i32 -> vector<4x256xf32>
    %c0_37 = arith.constant 0 : index
    %c0_38 = arith.constant 0 : index
    %71 = vector.load %arg2[%c0_37, %c0_38] : memref<9x256xf32, #tpu.memory_space<vmem>>, vector<1x256xf32>
    %72 = vector.broadcast %71 : vector<1x256xf32> to vector<4x256xf32>
    %73 = arith.mulf %70, %72 : vector<4x256xf32>
    %c0_39 = arith.constant 0 : index
    %c0_40 = arith.constant 0 : index
    %74 = vector.load %arg10[%c0_39, %c0_40] : memref<36x256xf32, #tpu.memory_space<vmem>>, vector<4x256xf32>
    tpu.vector_store %arg10[%c0_39, %c0_40], %73 {strides = array<i32>} : memref<36x256xf32, #tpu.memory_space<vmem>>, vector<4x256xf32>,
    %c16_i32_41 = arith.constant 16 : i32
    %75 = tpu.dynamic_rotate %69 by %c16_i32_41 dim 1 : vector<4x256xf32>, i32 -> vector<4x256xf32>
    %c1_42 = arith.constant 1 : index
    %c0_43 = arith.constant 0 : index
    %76 = vector.load %arg2[%c1_42, %c0_43] : memref<9x256xf32, #tpu.memory_space<vmem>>, vector<1x256xf32>
    %77 = vector.broadcast %76 : vector<1x256xf32> to vector<4x256xf32>
    %78 = arith.mulf %75, %77 : vector<4x256xf32>
    %c4_44 = arith.constant 4 : index
    %c0_45 = arith.constant 0 : index
    %79 = vector.load %arg10[%c4_44, %c0_45] : memref<36x256xf32, #tpu.memory_space<vmem>>, vector<4x256xf32>
    tpu.vector_store %arg10[%c4_44, %c0_45], %78 {strides = array<i32>} : memref<36x256xf32, #tpu.memory_space<vmem>>, vector<4x256xf32>,
    %c15_i32_46 = arith.constant 15 : i32
    %80 = tpu.dynamic_rotate %69 by %c15_i32_46 dim 1 : vector<4x256xf32>, i32 -> vector<4x256xf32>
    %c2_47 = arith.constant 2 : index
    %c0_48 = arith.constant 0 : index
    %81 = vector.load %arg2[%c2_47, %c0_48] : memref<9x256xf32, #tpu.memory_space<vmem>>, vector<1x256xf32>
    %82 = vector.broadcast %81 : vector<1x256xf32> to vector<4x256xf32>
    %83 = arith.mulf %80, %82 : vector<4x256xf32>
    %c8_49 = arith.constant 8 : index
    %c0_50 = arith.constant 0 : index
    %84 = vector.load %arg10[%c8_49, %c0_50] : memref<36x256xf32, #tpu.memory_space<vmem>>, vector<4x256xf32>
    tpu.vector_store %arg10[%c8_49, %c0_50], %83 {strides = array<i32>} : memref<36x256xf32, #tpu.memory_space<vmem>>, vector<4x256xf32>,
    %c1_i32_51 = arith.constant 1 : i32
    %85 = tpu.dynamic_rotate %69 by %c1_i32_51 dim 1 : vector<4x256xf32>, i32 -> vector<4x256xf32>
    %c3_52 = arith.constant 3 : index
    %c0_53 = arith.constant 0 : index
    %86 = vector.load %arg2[%c3_52, %c0_53] : memref<9x256xf32, #tpu.memory_space<vmem>>, vector<1x256xf32>
    %87 = vector.broadcast %86 : vector<1x256xf32> to vector<4x256xf32>
    %88 = arith.mulf %85, %87 : vector<4x256xf32>
    %c12_54 = arith.constant 12 : index
    %c0_55 = arith.constant 0 : index
    %89 = vector.load %arg10[%c12_54, %c0_55] : memref<36x256xf32, #tpu.memory_space<vmem>>, vector<4x256xf32>
    tpu.vector_store %arg10[%c12_54, %c0_55], %88 {strides = array<i32>} : memref<36x256xf32, #tpu.memory_space<vmem>>, vector<4x256xf32>,
    %c16_56 = arith.constant 16 : index
    %c0_57 = arith.constant 0 : index
    %90 = vector.load %arg10[%c16_56, %c0_57] : memref<36x256xf32, #tpu.memory_space<vmem>>, vector<4x256xf32>
    tpu.vector_store %arg10[%c16_56, %c0_57], %69 {strides = array<i32>} : memref<36x256xf32, #tpu.memory_space<vmem>>, vector<4x256xf32>,
    %c255_i32_58 = arith.constant 255 : i32
    %91 = tpu.dynamic_rotate %69 by %c255_i32_58 dim 1 : vector<4x256xf32>, i32 -> vector<4x256xf32>
    %c5_59 = arith.constant 5 : index
    %c0_60 = arith.constant 0 : index
    %92 = vector.load %arg2[%c5_59, %c0_60] : memref<9x256xf32, #tpu.memory_space<vmem>>, vector<1x256xf32>
    %93 = vector.broadcast %92 : vector<1x256xf32> to vector<4x256xf32>
    %94 = arith.mulf %91, %93 : vector<4x256xf32>
    %c20_61 = arith.constant 20 : index
    %c0_62 = arith.constant 0 : index
    %95 = vector.load %arg10[%c20_61, %c0_62] : memref<36x256xf32, #tpu.memory_space<vmem>>, vector<4x256xf32>
    tpu.vector_store %arg10[%c20_61, %c0_62], %94 {strides = array<i32>} : memref<36x256xf32, #tpu.memory_space<vmem>>, vector<4x256xf32>,
    %c241_i32_63 = arith.constant 241 : i32
    %96 = tpu.dynamic_rotate %69 by %c241_i32_63 dim 1 : vector<4x256xf32>, i32 -> vector<4x256xf32>
    %c6_64 = arith.constant 6 : index
    %c0_65 = arith.constant 0 : index
    %97 = vector.load %arg2[%c6_64, %c0_65] : memref<9x256xf32, #tpu.memory_space<vmem>>, vector<1x256xf32>
    %98 = vector.broadcast %97 : vector<1x256xf32> to vector<4x256xf32>
    %99 = arith.mulf %96, %98 : vector<4x256xf32>
    %c24_66 = arith.constant 24 : index
    %c0_67 = arith.constant 0 : index
    %100 = vector.load %arg10[%c24_66, %c0_67] : memref<36x256xf32, #tpu.memory_space<vmem>>, vector<4x256xf32>
    tpu.vector_store %arg10[%c24_66, %c0_67], %99 {strides = array<i32>} : memref<36x256xf32, #tpu.memory_space<vmem>>, vector<4x256xf32>,
    %c240_i32_68 = arith.constant 240 : i32
    %101 = tpu.dynamic_rotate %69 by %c240_i32_68 dim 1 : vector<4x256xf32>, i32 -> vector<4x256xf32>
    %c7_69 = arith.constant 7 : index
    %c0_70 = arith.constant 0 : index
    %102 = vector.load %arg2[%c7_69, %c0_70] : memref<9x256xf32, #tpu.memory_space<vmem>>, vector<1x256xf32>
    %103 = vector.broadcast %102 : vector<1x256xf32> to vector<4x256xf32>
    %104 = arith.mulf %101, %103 : vector<4x256xf32>
    %c28_71 = arith.constant 28 : index
    %c0_72 = arith.constant 0 : index
    %105 = vector.load %arg10[%c28_71, %c0_72] : memref<36x256xf32, #tpu.memory_space<vmem>>, vector<4x256xf32>
    tpu.vector_store %arg10[%c28_71, %c0_72], %104 {strides = array<i32>} : memref<36x256xf32, #tpu.memory_space<vmem>>, vector<4x256xf32>,
    %c239_i32_73 = arith.constant 239 : i32
    %106 = tpu.dynamic_rotate %69 by %c239_i32_73 dim 1 : vector<4x256xf32>, i32 -> vector<4x256xf32>
    %c8_74 = arith.constant 8 : index
    %c0_75 = arith.constant 0 : index
    %107 = vector.load %arg2[%c8_74, %c0_75] : memref<9x256xf32, #tpu.memory_space<vmem>>, vector<1x256xf32>
    %108 = vector.broadcast %107 : vector<1x256xf32> to vector<4x256xf32>
    %109 = arith.mulf %106, %108 : vector<4x256xf32>
    %c32_76 = arith.constant 32 : index
    %c0_77 = arith.constant 0 : index
    %110 = vector.load %arg10[%c32_76, %c0_77] : memref<36x256xf32, #tpu.memory_space<vmem>>, vector<4x256xf32>
    tpu.vector_store %arg10[%c32_76, %c0_77], %109 {strides = array<i32>} : memref<36x256xf32, #tpu.memory_space<vmem>>, vector<4x256xf32>,
    %c0_78 = arith.constant 0 : index
    %c0_79 = arith.constant 0 : index
    %111 = vector.load %arg6[%c0_78, %c0_79] : memref<4x36xf32, #tpu.memory_space<vmem>>, vector<4x36xf32>
    %c0_80 = arith.constant 0 : index
    %c0_81 = arith.constant 0 : index
    %112 = vector.load %arg10[%c0_80, %c0_81] : memref<36x256xf32, #tpu.memory_space<vmem>>, vector<36x256xf32>
    %cst_82 = arith.constant dense<0.000000e+00> : vector<4x256xf32>
    %113 = tpu.matmul %111, %112, %cst_82 {dimension_numbers = #tpu.dot_dimension_numbers<[1], [0], [0], [1], [0, 0, 1, 1], [], []>} : vector<4x36xf32>, vector<36x256xf32>, vector<4x256xf32> -> vector<4x256xf32>
    %cst_83 = arith.constant dense<0.000000e+00> : vector<4xf32>
    %114 = vector.multi_reduction <add>, %113, %cst_83 [1] : vector<4x256xf32> to vector<4xf32>
    %115 = vector.shape_cast %114 : vector<4xf32> to vector<4x1xf32>
    %cst_84 = arith.constant 2.560000e+02 : f32
    %116 = vector.broadcast %cst_84 : f32 to vector<4x1xf32>
    %117 = arith.divf %115, %116 : vector<4x1xf32>
    %118 = vector.broadcast %117 : vector<4x1xf32> to vector<4x256xf32>
    %119 = arith.subf %113, %118 : vector<4x256xf32>
    %120 = arith.mulf %119, %119 : vector<4x256xf32>
    %cst_85 = arith.constant dense<0.000000e+00> : vector<4xf32>
    %121 = vector.multi_reduction <add>, %120, %cst_85 [1] : vector<4x256xf32> to vector<4xf32>
    %122 = vector.shape_cast %121 : vector<4xf32> to vector<4x1xf32>
    %cst_86 = arith.constant 2.560000e+02 : f32
    %123 = vector.broadcast %cst_86 : f32 to vector<4x1xf32>
    %124 = arith.divf %122, %123 : vector<4x1xf32>
    %cst_87 = arith.constant 9.99999974E-6 : f32
    %125 = vector.broadcast %cst_87 : f32 to vector<4x1xf32>
    %126 = arith.addf %124, %125 : vector<4x1xf32>
    %127 = math.rsqrt %126 : vector<4x1xf32>
    %128 = vector.broadcast %127 : vector<4x1xf32> to vector<4x256xf32>
    %129 = arith.mulf %119, %128 : vector<4x256xf32>
    %c0_88 = arith.constant 0 : index
    %c0_89 = arith.constant 0 : index
    %130 = vector.load %arg7[%c0_88, %c0_89] : memref<4x1xf32, #tpu.memory_space<vmem>>, vector<4x1xf32>
    %131 = vector.broadcast %130 : vector<4x1xf32> to vector<4x256xf32>
    %132 = arith.mulf %129, %131 : vector<4x256xf32>
    %c0_90 = arith.constant 0 : index
    %c0_91 = arith.constant 0 : index
    %133 = vector.load %arg8[%c0_90, %c0_91] : memref<4x1xf32, #tpu.memory_space<vmem>>, vector<4x1xf32>
    %134 = vector.broadcast %133 : vector<4x1xf32> to vector<4x256xf32>
    %135 = arith.addf %132, %134 : vector<4x256xf32>
    %136 = arith.addf %1, %135 : vector<4x256xf32>
    %c0_92 = arith.constant 0 : index
    %c0_93 = arith.constant 0 : index
    %c0_94 = arith.constant 0 : index
    %137 = vector.load %arg9[%c0_92, %c0_93, %c0_94] : memref<1x4x256xf32, #tpu.memory_space<vmem>>, vector<1x4x256xf32>
    %138 = vector.shape_cast %137 : vector<1x4x256xf32> to vector<4x256xf32>
    %139 = vector.shape_cast %136 : vector<4x256xf32> to vector<1x4x256xf32>
    tpu.vector_store %arg9[%c0_92, %c0_93, %c0_94], %139 {strides = array<i32>} : memref<1x4x256xf32, #tpu.memory_space<vmem>>, vector<1x4x256xf32>,
    return
  }
  func.func @transform_0(%arg0: i32) -> (i32, i32, i32) {
    %c0_i32 = arith.constant 0 : i32
    %c0_i32_0 = arith.constant 0 : i32
    %c0_i32_1 = arith.constant 0 : i32
    return %arg0, %c0_i32, %c0_i32_0 : i32, i32, i32
  }
  func.func @transform_1(%arg0: i32) -> (i32, i32) {
    %c0_i32 = arith.constant 0 : i32
    %c0_i32_0 = arith.constant 0 : i32
    %c0_i32_1 = arith.constant 0 : i32
    return %c0_i32, %c0_i32_0 : i32, i32
  }
  func.func @transform_2(%arg0: i32) -> (i32, i32) {
    %c0_i32 = arith.constant 0 : i32
    %c0_i32_0 = arith.constant 0 : i32
    %c0_i32_1 = arith.constant 0 : i32
    return %c0_i32, %c0_i32_0 : i32, i32
  }
  func.func @transform_3(%arg0: i32) -> (i32, i32) {
    %c0_i32 = arith.constant 0 : i32
    %c0_i32_0 = arith.constant 0 : i32
    %c0_i32_1 = arith.constant 0 : i32
    return %c0_i32, %c0_i32_0 : i32, i32
  }
  func.func @transform_4(%arg0: i32) -> (i32, i32) {
    %c0_i32 = arith.constant 0 : i32
    %c0_i32_0 = arith.constant 0 : i32
    %c0_i32_1 = arith.constant 0 : i32
    return %c0_i32, %c0_i32_0 : i32, i32
  }
  func.func @transform_5(%arg0: i32) -> (i32, i32) {
    %c0_i32 = arith.constant 0 : i32
    %c0_i32_0 = arith.constant 0 : i32
    %c0_i32_1 = arith.constant 0 : i32
    return %c0_i32, %c0_i32_0 : i32, i32
  }
  func.func @transform_6(%arg0: i32) -> (i32, i32) {
    %c0_i32 = arith.constant 0 : i32
    %c0_i32_0 = arith.constant 0 : i32
    %c0_i32_1 = arith.constant 0 : i32
    return %c0_i32, %c0_i32_0 : i32, i32
  }
  func.func @transform_7(%arg0: i32) -> (i32, i32) {
    %c0_i32 = arith.constant 0 : i32
    %c0_i32_0 = arith.constant 0 : i32
    %c0_i32_1 = arith.constant 0 : i32
    return %c0_i32, %c0_i32_0 : i32, i32
  }
  func.func @transform_8(%arg0: i32) -> (i32, i32, i32) {
    %c0_i32 = arith.constant 0 : i32
    %c0_i32_0 = arith.constant 0 : i32
    %c0_i32_1 = arith.constant 0 : i32
    return %arg0, %c0_i32, %c0_i32_0 : i32, i32, i32
  }
}

</mosaic_0001>

<llo_original>
// kernel: tpu_custom_call.1
$region0: #{tpu_custom_call.1}
  #allocation0 [shape = 'u32[]', space=smem, size = 0x4, offset = 0x4, fixed_abs, tag = 'smem constant byte address 0x4 - core index']
  #allocation1 [shape = 'u32[144,128]{1,0:T(1,128)}', space=vmem, size = 0x12000, scoped, tag = 'internal scratch']
  #allocation2 [shape = 'f32[36,256]{1,0:T(8,128)}', space=vmem, size = 0xa000, scoped, tag = 'scratch operand']
  %s0 = inlined_call_operand.vmem [shape: f32[2,4,256], index: 0, kind: input, shape index: {}]
  %s1 = inlined_call_operand.hbm [shape: f32[9,256], index: 1, kind: input, shape index: {}]
  %s2 = inlined_call_operand.vmem [shape: f32[4,36], index: 2, kind: input, shape index: {}]
  %s3 = inlined_call_operand.vmem [shape: f32[4,1], index: 3, kind: input, shape index: {}]
  %s4 = inlined_call_operand.vmem [shape: f32[4,1], index: 4, kind: input, shape index: {}]
  %s5 = inlined_call_operand.vmem [shape: f32[4,36], index: 5, kind: input, shape index: {}]
  %s6 = inlined_call_operand.vmem [shape: f32[4,1], index: 6, kind: input, shape index: {}]
  %s7 = inlined_call_operand.vmem [shape: f32[4,1], index: 7, kind: input, shape index: {}]
  %s8 = inlined_call_operand.hbm [shape: f32[2,4,256], index: 8, kind: output, shape index: {}]
  %s9 = sld [smem:[#allocation0]]
  $region69: #{tpu_custom_call.1} parent=0
    _
  %s11 = ssub.s32 1, %s9
  %s12 = scalar_select 0, %s11, %s9
  $region1: #{tpu_custom_call.1} parent=0
    #allocation3 [shape = 'u8[16384]{0}', space=vmem, size = 0x4000, scoped, tag = 'input window, operand 1, single buffered']
    #allocation4 [shape = 's32[2]{0}', space=sflag, size = 0x8, scoped, tag = 'scoped memory for tpu_custom_call.1']
    #allocation5 [shape = 's32[2]{0}', space=sflag, size = 0x8, scoped, tag = 'scoped memory for tpu_custom_call.1']
    #allocation6 [shape = 'u8[8192]{0}', space=vmem, size = 0x2000, scoped, tag = 'output window, operand 0']
    %13 = vsyncpa [#allocation4], 0
    %14 = vsyncpa [#allocation5], 0
    %s15 = scalar_lea.sflag [#allocation5], 1
    %16 = vsyncpa %s15, 0
    loop: start=0, step=1, limit=4
    $region2: #{tpu_custom_call.1} parent=1 // loop_pre_header
      _
    $region3: #{tpu_custom_call.1} parent=1 // loop_header
      %s18 = sphi 0, %s22
      %p19 = scmp.ge.s32.totalorder %s18, 4
      %s28 = sphi 0, %s30
      %s31 = sphi 0, %s28
      %s32 = sphi 0, %s31
      %s48 = sphi 0, %s32
      %s52 = sphi 0, %s52
      %s54 = sphi 0, %s52
      %s55 = sphi 0, %s54
      %s69 = sphi 0, %s55
      %s73 = sphi 0, %s73
      %s75 = sphi 0, %s73
      %s76 = sphi 0, %s75
      %s90 = sphi 0, %s76
      %s94 = sphi 0, %s94
      %s96 = sphi 0, %s94
      %s97 = sphi 0, %s96
      %s111 = sphi 0, %s97
      %s115 = sphi 0, %s115
      %s117 = sphi 0, %s115
      %s118 = sphi 0, %s117
      %s132 = sphi 0, %s118
      %s136 = sphi 0, %s136
      %s138 = sphi 0, %s136
      %s139 = sphi 0, %s138
      %s153 = sphi 0, %s139
      %s157 = sphi 0, %s157
      %s159 = sphi 0, %s157
      %s160 = sphi 0, %s159
      %s174 = sphi 0, %s160
      %s178 = sphi 0, %s178
      %s180 = sphi 0, %s178
      %s181 = sphi 0, %s180
      %s195 = sphi 0, %s181
      %s201 = sphi 0, %s203
      %s204 = sphi 0, %s201
      %s205 = sphi 0, %s204
      %s221 = sphi 0, %s205
    $region4: #{tpu_custom_call.1} parent=1 // loop_header_branch
      %21 = sbr.rel (%p19) target = $region8
    $region5: #{tpu_custom_call.1} parent=1 // loop_body
      %s23 = ssub.s32 %s18, 1
      %s24 = ssub.s32 %s18, 2
      %s25 = sadd.s32 %s18, 1
      %s26 = ssub.s32 %s18, %s25
      %p27 = scmp.eq.s32.totalorder %s26, 0
      %s29 = sadd.s32 %s28, 1
      %s30 = scalar_select %p27, %s28, %s29
      %p33 = pneg %p27
      %p34 = scmp.eq.s32.totalorder %s18, 1
      %p35 = por %p33, %p34
      %p36 = scmp.ne.s32.totalorder %s28, %s31
      %p37 = scmp.eq.s32.totalorder %s18, 0
      %p38 = por %p36, %p37
      %p39 = scmp.ne.s32.totalorder %s28, %s31
      %p40 = scmp.eq.s32.totalorder %s23, 1
      %p41 = por %p39, %p40
      %p42 = scmp.ne.s32.totalorder %s31, %s32
      %p43 = scmp.eq.s32.totalorder %s23, 0
      %p44 = por %p42, %p43
      %p45 = scmp.ne.s32.totalorder %s31, %s32
      %p46 = scmp.eq.s32.totalorder %s24, 1
      %p47 = por %p45, %p46
      %p49 = scmp.ne.s32.totalorder %s32, %s48
      %p50 = scmp.eq.s32.totalorder %s24, 0
      %p51 = por %p49, %p50
      %s53 = sadd.s32 %s52, 1
      %p56 = scmp.eq.s32.totalorder %s18, 1
      %p57 = scmp.ne.s32.totalorder %s52, %s54
      %p58 = scmp.eq.s32.totalorder %s18, 0
      %p59 = por %p57, %p58
      %p60 = scmp.ne.s32.totalorder %s52, %s54
      %p61 = scmp.eq.s32.totalorder %s23, 1
      %p62 = por %p60, %p61
      %p63 = scmp.ne.s32.totalorder %s54, %s55
      %p64 = scmp.eq.s32.totalorder %s23, 0
      %p65 = por %p63, %p64
      %p66 = scmp.ne.s32.totalorder %s54, %s55
      %p67 = scmp.eq.s32.totalorder %s24, 1
      %p68 = por %p66, %p67
      %p70 = scmp.ne.s32.totalorder %s55, %s69
      %p71 = scmp.eq.s32.totalorder %s24, 0
      %p72 = por %p70, %p71
      %s74 = sadd.s32 %s73, 1
      %p77 = scmp.eq.s32.totalorder %s18, 1
      %p78 = scmp.ne.s32.totalorder %s73, %s75
      %p79 = scmp.eq.s32.totalorder %s18, 0
      %p80 = por %p78, %p79
      %p81 = scmp.ne.s32.totalorder %s73, %s75
      %p82 = scmp.eq.s32.totalorder %s23, 1
      %p83 = por %p81, %p82
      %p84 = scmp.ne.s32.totalorder %s75, %s76
      %p85 = scmp.eq.s32.totalorder %s23, 0
      %p86 = por %p84, %p85
      %p87 = scmp.ne.s32.totalorder %s75, %s76
      %p88 = scmp.eq.s32.totalorder %s24, 1
      %p89 = por %p87, %p88
      %p91 = scmp.ne.s32.totalorder %s76, %s90
      %p92 = scmp.eq.s32.totalorder %s24, 0
      %p93 = por %p91, %p92
      %s95 = sadd.s32 %s94, 1
      %p98 = scmp.eq.s32.totalorder %s18, 1
      %p99 = scmp.ne.s32.totalorder %s94, %s96
      %p100 = scmp.eq.s32.totalorder %s18, 0
      %p101 = por %p99, %p100
      %p102 = scmp.ne.s32.totalorder %s94, %s96
      %p103 = scmp.eq.s32.totalorder %s23, 1
      %p104 = por %p102, %p103
      %p105 = scmp.ne.s32.totalorder %s96, %s97
      %p106 = scmp.eq.s32.totalorder %s23, 0
      %p107 = por %p105, %p106
      %p108 = scmp.ne.s32.totalorder %s96, %s97
      %p109 = scmp.eq.s32.totalorder %s24, 1
      %p110 = por %p108, %p109
      %p112 = scmp.ne.s32.totalorder %s97, %s111
      %p113 = scmp.eq.s32.totalorder %s24, 0
      %p114 = por %p112, %p113
      %s116 = sadd.s32 %s115, 1
      %p119 = scmp.eq.s32.totalorder %s18, 1
      %p120 = scmp.ne.s32.totalorder %s115, %s117
      %p121 = scmp.eq.s32.totalorder %s18, 0
      %p122 = por %p120, %p121
      %p123 = scmp.ne.s32.totalorder %s115, %s117
      %p124 = scmp.eq.s32.totalorder %s23, 1
      %p125 = por %p123, %p124
      %p126 = scmp.ne.s32.totalorder %s117, %s118
      %p127 = scmp.eq.s32.totalorder %s23, 0
      %p128 = por %p126, %p127
      %p129 = scmp.ne.s32.totalorder %s117, %s118
      %p130 = scmp.eq.s32.totalorder %s24, 1
      %p131 = por %p129, %p130
      %p133 = scmp.ne.s32.totalorder %s118, %s132
      %p134 = scmp.eq.s32.totalorder %s24, 0
      %p135 = por %p133, %p134
      %s137 = sadd.s32 %s136, 1
      %p140 = scmp.eq.s32.totalorder %s18, 1
      %p141 = scmp.ne.s32.totalorder %s136, %s138
      %p142 = scmp.eq.s32.totalorder %s18, 0
      %p143 = por %p141, %p142
      %p144 = scmp.ne.s32.totalorder %s136, %s138
      %p145 = scmp.eq.s32.totalorder %s23, 1
      %p146 = por %p144, %p145
      %p147 = scmp.ne.s32.totalorder %s138, %s139
      %p148 = scmp.eq.s32.totalorder %s23, 0
      %p149 = por %p147, %p148
      %p150 = scmp.ne.s32.totalorder %s138, %s139
      %p151 = scmp.eq.s32.totalorder %s24, 1
      %p152 = por %p150, %p151
      %p154 = scmp.ne.s32.totalorder %s139, %s153
      %p155 = scmp.eq.s32.totalorder %s24, 0
      %p156 = por %p154, %p155
      %s158 = sadd.s32 %s157, 1
      %p161 = scmp.eq.s32.totalorder %s18, 1
      %p162 = scmp.ne.s32.totalorder %s157, %s159
      %p163 = scmp.eq.s32.totalorder %s18, 0
      %p164 = por %p162, %p163
      %p165 = scmp.ne.s32.totalorder %s157, %s159
      %p166 = scmp.eq.s32.totalorder %s23, 1
      %p167 = por %p165, %p166
      %p168 = scmp.ne.s32.totalorder %s159, %s160
      %p169 = scmp.eq.s32.totalorder %s23, 0
      %p170 = por %p168, %p169
      %p171 = scmp.ne.s32.totalorder %s159, %s160
      %p172 = scmp.eq.s32.totalorder %s24, 1
      %p173 = por %p171, %p172
      %p175 = scmp.ne.s32.totalorder %s160, %s174
      %p176 = scmp.eq.s32.totalorder %s24, 0
      %p177 = por %p175, %p176
      %s179 = sadd.s32 %s178, 1
      %p182 = scmp.eq.s32.totalorder %s18, 1
      %p183 = scmp.ne.s32.totalorder %s178, %s180
      %p184 = scmp.eq.s32.totalorder %s18, 0
      %p185 = por %p183, %p184
      %p186 = scmp.ne.s32.totalorder %s178, %s180
      %p187 = scmp.eq.s32.totalorder %s23, 1
      %p188 = por %p186, %p187
      %p189 = scmp.ne.s32.totalorder %s180, %s181
      %p190 = scmp.eq.s32.totalorder %s23, 0
      %p191 = por %p189, %p190
      %p192 = scmp.ne.s32.totalorder %s180, %s181
      %p193 = scmp.eq.s32.totalorder %s24, 1
      %p194 = por %p192, %p193
      %p196 = scmp.ne.s32.totalorder %s181, %s195
      %p197 = scmp.eq.s32.totalorder %s24, 0
      %p198 = por %p196, %p197
      %s199 = ssub.s32 %s18, %s25
      %p200 = scmp.eq.s32.totalorder %s199, 0
      %s202 = sadd.s32 %s201, 1
      %s203 = scalar_select %p200, %s201, %s202
      %p206 = pneg %p200
      %p207 = scmp.eq.s32.totalorder %s18, 1
      %p208 = por %p206, %p207
      %p209 = scmp.ne.s32.totalorder %s201, %s204
      %p210 = scmp.eq.s32.totalorder %s18, 0
      %p211 = por %p209, %p210
      %p212 = scmp.ne.s32.totalorder %s201, %s204
      %p213 = scmp.eq.s32.totalorder %s23, 1
      %p214 = por %p212, %p213
      %p215 = scmp.ne.s32.totalorder %s204, %s205
      %p216 = scmp.eq.s32.totalorder %s23, 0
      %p217 = por %p215, %p216
      %p218 = scmp.ne.s32.totalorder %s204, %s205
      %p219 = scmp.eq.s32.totalorder %s24, 1
      %p220 = por %p218, %p219
      %p222 = scmp.ne.s32.totalorder %s205, %s221
      %p223 = scmp.eq.s32.totalorder %s24, 0
      %p224 = por %p222, %p223
      %p225 = scmp.le.s32.totalorder 1, %s18
      %p226 = scmp.lt.s32.totalorder %s18, 3
      %p227 = pnand %p225, %p226
      %p228 = pneg %p227
      // Predicated region
      $region9: #{tpu_custom_call.1} parent=5 // pred_check
        _
      $region10: #{tpu_custom_call.1} parent=5 // pred_check_branch
        %230 = sbr.rel (%p227) target = $region12
      $region11: #{tpu_custom_call.1} parent=5 // pred_region
        %s231 = ssub.s32 %s18, 1
        // Predicated region
        $region13: #{tpu_custom_call.1} parent=11 // pred_check
          %p232 = pneg %p65
        $region14: #{tpu_custom_call.1} parent=11 // pred_check_branch
          %234 = sbr.rel (%p232) target = $region16
        $region15: #{tpu_custom_call.1} parent=11 // pred_region
          %s236 = ssub.s32 512, 512
          %237 = vsyncadd [#allocation4], %s236
          %s238 = sshll.u32 [#allocation3], 4
          %s239 = int_to_ptr.vmem [resolvable:$true] %s238
          %244 = dma.hbm_to_vmem [thread:$0]  %s1, 512, %s239, [#allocation4], 256, 256, 16
        $region16: #{tpu_custom_call.1} parent=11 // pred_fallthru
          _
        // Predicated region
        $region17: #{tpu_custom_call.1} parent=11 // pred_check
          %p245 = pneg %p86
        $region18: #{tpu_custom_call.1} parent=11 // pred_check_branch
          %247 = sbr.rel (%p245) target = $region20
        $region19: #{tpu_custom_call.1} parent=11 // pred_region
          _
        $region20: #{tpu_custom_call.1} parent=11 // pred_fallthru
          _
        // Predicated region
        $region21: #{tpu_custom_call.1} parent=11 // pred_check
          %p248 = pneg %p107
        $region22: #{tpu_custom_call.1} parent=11 // pred_check_branch
          %250 = sbr.rel (%p248) target = $region24
        $region23: #{tpu_custom_call.1} parent=11 // pred_region
          _
        $region24: #{tpu_custom_call.1} parent=11 // pred_fallthru
          _
        // Predicated region
        $region25: #{tpu_custom_call.1} parent=11 // pred_check
          %p251 = pneg %p128
        $region26: #{tpu_custom_call.1} parent=11 // pred_check_branch
          %253 = sbr.rel (%p251) target = $region28
        $region27: #{tpu_custom_call.1} parent=11 // pred_region
          _
        $region28: #{tpu_custom_call.1} parent=11 // pred_fallthru
          _
        // Predicated region
        $region29: #{tpu_custom_call.1} parent=11 // pred_check
          %p254 = pneg %p149
        $region30: #{tpu_custom_call.1} parent=11 // pred_check_branch
          %256 = sbr.rel (%p254) target = $region32
        $region31: #{tpu_custom_call.1} parent=11 // pred_region
          _
        $region32: #{tpu_custom_call.1} parent=11 // pred_fallthru
          _
        // Predicated region
        $region33: #{tpu_custom_call.1} parent=11 // pred_check
          %p257 = pneg %p170
        $region34: #{tpu_custom_call.1} parent=11 // pred_check_branch
          %259 = sbr.rel (%p257) target = $region36
        $region35: #{tpu_custom_call.1} parent=11 // pred_region
          _
        $region36: #{tpu_custom_call.1} parent=11 // pred_fallthru
          _
        // Predicated region
        $region37: #{tpu_custom_call.1} parent=11 // pred_check
          %p260 = pneg %p191
        $region38: #{tpu_custom_call.1} parent=11 // pred_check_branch
          %262 = sbr.rel (%p260) target = $region40
        $region39: #{tpu_custom_call.1} parent=11 // pred_region
          _
        $region40: #{tpu_custom_call.1} parent=11 // pred_fallthru
          _
      $region12: #{tpu_custom_call.1} parent=5 // pred_fallthru
        _
      %p263 = scmp.lt.s32.totalorder %s18, 2
      // Predicated region
      $region41: #{tpu_custom_call.1} parent=5 // pred_check
        %p264 = pneg %p263
      $region42: #{tpu_custom_call.1} parent=5 // pred_check_branch
        %266 = sbr.rel (%p264) target = $region44
      $region43: #{tpu_custom_call.1} parent=5 // pred_region
        // Predicated region
        $region45: #{tpu_custom_call.1} parent=43 // pred_check
          %p267 = pneg %p38
        $region46: #{tpu_custom_call.1} parent=43 // pred_check_branch
          %269 = sbr.rel (%p267) target = $region48
        $region47: #{tpu_custom_call.1} parent=43 // pred_region
          %p270 = scmp.lt.s32.totalorder %s18, 1
          %s271 = scalar_select %p270, %s18, 1
          %s272 = smul.addr %s271, 2
          %s273 = smul.addr %s272, 4
          %s274 = scalar_lea.vmem %s0, %s273
        $region48: #{tpu_custom_call.1} parent=43 // pred_fallthru
          _
      $region44: #{tpu_custom_call.1} parent=5 // pred_fallthru
        _
      %p275 = scmp.le.s32.totalorder 1, %s18
      %p276 = scmp.lt.s32.totalorder %s18, 3
      %p277 = pnand %p275, %p276
      %p278 = pneg %p277
      // Predicated region
      $region49: #{tpu_custom_call.1} parent=5 // pred_check
        _
      $region50: #{tpu_custom_call.1} parent=5 // pred_check_branch
        %280 = sbr.rel (%p277) target = $region52
      $region51: #{tpu_custom_call.1} parent=5 // pred_region
        %s281 = ssub.s32 %s18, 1
        // Predicated region
        $region53: #{tpu_custom_call.1} parent=51 // pred_check
          %p282 = pneg %p65
        $region54: #{tpu_custom_call.1} parent=51 // pred_check_branch
          %284 = sbr.rel (%p282) target = $region56
        $region55: #{tpu_custom_call.1} parent=51 // pred_region
          %285 = dma.done [#allocation4], 512
        $region56: #{tpu_custom_call.1} parent=51 // pred_fallthru
          _
        %p286 = scmp.lt.s32.totalorder %s23, 1
        %s287 = scalar_select %p286, %s23, 1
        %s288 = smul.addr %s287, 2
        %s289 = smul.addr %s288, 4
        %s290 = scalar_lea.vmem %s0, %s289
        %p291 = pneg %p44
        %p292 = pneg %p41
        %p293 = pneg %p65
        %p294 = pneg %p62
        %p295 = pneg %p86
        %p296 = pneg %p83
        %p297 = pneg %p107
        %p298 = pneg %p104
        %p299 = pneg %p128
        %p300 = pneg %p125
        %p301 = pneg %p149
        %p302 = pneg %p146
        %p303 = pneg %p170
        %p304 = pneg %p167
        %p305 = pneg %p191
        %p306 = pneg %p188
        %p307 = pneg %p217
        %p308 = pneg %p214
        %s309 = sand.u32 %s204, 1
        %s310 = scalar_lea.sflag [#allocation5], %s309
        %s311 = sand.u32 %s204, 1
        %s312 = smul.addr %s311, 8
        %s313 = scalar_lea.vmem [#allocation6], %s312
        %p314 = scmp.lt.s32.totalorder %s23, 1
        %s315 = scalar_select %p314, %s23, 1
        %s316 = smul.addr %s315, 2
        %s317 = smul.addr %s316, 4
        %s318 = scalar_lea.vmem %s0, %s317
        %v319 = vld [vmem:[%s318] sm:$0xff]
        %v321 = vcombine.high %v319, %v319
        %323 = vrot.lane.b32.xlu0 %v319, 17
        %v324 = vpop.permute.xlu0 %323
        %325 = vrot.lane.b32.xlu0 %v321, 17
        %v326 = vpop.permute.xlu0 %325
        %v327 = vlaneseq
        %v328 = vand.u32 %v327, 127
        %vm329 = vcmp.lt.s32.totalorder %v328, 17
        %v330 = vsel %vm329, %v324, %v326
        %v331 = vsel %vm329, %v326, %v324
        %v332 = vld [vmem:[#allocation3] ss:$8 sm:$0x3]
        %v334 = vlaneseq
        %v335 = vshrl.u32 %v334, 7
        %v336 = vsub.s32 0, %v335
        %v337 = vrot.slane %v332, %v336
        %v338 = vlaneseq
        %v339 = vshrl.u32 %v338, 7
        %v340 = vsub.s32 1, %v339
        %v341 = vrot.slane %v332, %v340
        %v344 = vmul.f32 %v331, %v337
        %v345 = vmul.f32 %v330, %v341
        %346 = vst [vmem:[#allocation2] sm:$0xf] %v344
        %347 = vst [vmem:[#allocation2 + $0x8] sm:$0xf] %v345
        %348 = vrot.lane.b32.xlu0 %v319, 16
        %v349 = vpop.permute.xlu0 %348
        %350 = vrot.lane.b32.xlu0 %v321, 16
        %v351 = vpop.permute.xlu0 %350
        %vm352 = vcmp.lt.s32.totalorder %v328, 16
        %v353 = vsel %vm352, %v349, %v351
        %v354 = vsel %vm352, %v351, %v349
        %s355 = scalar_lea.vmem [#allocation3], 1
        %v356 = vld [vmem:[%s355] ss:$8 sm:$0x3]
        %v358 = vlaneseq
        %v359 = vshrl.u32 %v358, 7
        %v360 = vsub.s32 0, %v359
        %v361 = vrot.slane %v356, %v360
        %v362 = vlaneseq
        %v363 = vshrl.u32 %v362, 7
        %v364 = vsub.s32 1, %v363
        %v365 = vrot.slane %v356, %v364
        %v368 = vmul.f32 %v354, %v361
        %v369 = vmul.f32 %v353, %v365
        %v372 = vrot.slane %v368, 4
        %v373 = vrot.slane %v369, 4
        %376 = vst [vmem:[#allocation2] sm:$0xf0] %v372
        %377 = vst [vmem:[#allocation2 + $0x8] sm:$0xf0] %v373
        %378 = vrot.lane.b32.xlu0 %v319, 15
        %v379 = vpop.permute.xlu0 %378
        %380 = vrot.lane.b32.xlu0 %v321, 15
        %v381 = vpop.permute.xlu0 %380
        %vm382 = vcmp.lt.s32.totalorder %v328, 15
        %v383 = vsel %vm382, %v379, %v381
        %v384 = vsel %vm382, %v381, %v379
        %s385 = scalar_lea.vmem [#allocation3], 2
        %v386 = vld [vmem:[%s385] ss:$8 sm:$0x3]
        %v388 = vlaneseq
        %v389 = vshrl.u32 %v388, 7
        %v390 = vsub.s32 0, %v389
        %v391 = vrot.slane %v386, %v390
        %v392 = vlaneseq
        %v393 = vshrl.u32 %v392, 7
        %v394 = vsub.s32 1, %v393
        %v395 = vrot.slane %v386, %v394
        %v398 = vmul.f32 %v384, %v391
        %v399 = vmul.f32 %v383, %v395
        %400 = vst [vmem:[#allocation2 + $0x10] sm:$0xf] %v398
        %401 = vst [vmem:[#allocation2 + $0x18] sm:$0xf] %v399
        %402 = vrot.lane.b32.xlu0 %v319, 1
        %v403 = vpop.permute.xlu0 %402
        %404 = vrot.lane.b32.xlu0 %v321, 1
        %v405 = vpop.permute.xlu0 %404
        %vm406 = vcmp.lt.s32.totalorder %v328, 1
        %v407 = vsel %vm406, %v403, %v405
        %v408 = vsel %vm406, %v405, %v403
        %s409 = scalar_lea.vmem [#allocation3], 3
        %v410 = vld [vmem:[%s409] ss:$8 sm:$0x3]
        %v412 = vlaneseq
        %v413 = vshrl.u32 %v412, 7
        %v414 = vsub.s32 0, %v413
        %v415 = vrot.slane %v410, %v414
        %v416 = vlaneseq
        %v417 = vshrl.u32 %v416, 7
        %v418 = vsub.s32 1, %v417
        %v419 = vrot.slane %v410, %v418
        %v422 = vmul.f32 %v408, %v415
        %v423 = vmul.f32 %v407, %v419
        %v426 = vrot.slane %v422, 4
        %v427 = vrot.slane %v423, 4
        %430 = vst [vmem:[#allocation2 + $0x10] sm:$0xf0] %v426
        %431 = vst [vmem:[#allocation2 + $0x18] sm:$0xf0] %v427
        %432 = vst [vmem:[#allocation2 + $0x20] sm:$0xf] %v319
        %433 = vst [vmem:[#allocation2 + $0x28] sm:$0xf] %v321
        %434 = vrot.lane.b32.xlu0 %v319, 127
        %v435 = vpop.permute.xlu0 %434
        %436 = vrot.lane.b32.xlu0 %v321, 127
        %v437 = vpop.permute.xlu0 %436
        %vm438 = vcmp.lt.s32.totalorder %v328, 127
        %v439 = vsel %vm438, %v435, %v437
        %v440 = vsel %vm438, %v437, %v435
        %s441 = scalar_lea.vmem [#allocation3], 5
        %v442 = vld [vmem:[%s441] ss:$8 sm:$0x3]
        %v444 = vlaneseq
        %v445 = vshrl.u32 %v444, 7
        %v446 = vsub.s32 0, %v445
        %v447 = vrot.slane %v442, %v446
        %v448 = vlaneseq
        %v449 = vshrl.u32 %v448, 7
        %v450 = vsub.s32 1, %v449
        %v451 = vrot.slane %v442, %v450
        %v454 = vmul.f32 %v439, %v447
        %v455 = vmul.f32 %v440, %v451
        %v458 = vrot.slane %v454, 4
        %v459 = vrot.slane %v455, 4
        %462 = vst [vmem:[#allocation2 + $0x20] sm:$0xf0] %v458
        %463 = vst [vmem:[#allocation2 + $0x28] sm:$0xf0] %v459
        %464 = vrot.lane.b32.xlu0 %v319, 113
        %v465 = vpop.permute.xlu0 %464
        %466 = vrot.lane.b32.xlu0 %v321, 113
        %v467 = vpop.permute.xlu0 %466
        %vm468 = vcmp.lt.s32.totalorder %v328, 113
        %v469 = vsel %vm468, %v465, %v467
        %v470 = vsel %vm468, %v467, %v465
        %s471 = scalar_lea.vmem [#allocation3], 6
        %v472 = vld [vmem:[%s471] ss:$8 sm:$0x3]
        %v474 = vlaneseq
        %v475 = vshrl.u32 %v474, 7
        %v476 = vsub.s32 0, %v475
        %v477 = vrot.slane %v472, %v476
        %v478 = vlaneseq
        %v479 = vshrl.u32 %v478, 7
        %v480 = vsub.s32 1, %v479
        %v481 = vrot.slane %v472, %v480
        %v484 = vmul.f32 %v469, %v477
        %v485 = vmul.f32 %v470, %v481
        %486 = vst [vmem:[#allocation2 + $0x30] sm:$0xf] %v484
        %487 = vst [vmem:[#allocation2 + $0x38] sm:$0xf] %v485
        %488 = vrot.lane.b32.xlu0 %v319, 112
        %v489 = vpop.permute.xlu0 %488
        %490 = vrot.lane.b32.xlu0 %v321, 112
        %v491 = vpop.permute.xlu0 %490
        %vm492 = vcmp.lt.s32.totalorder %v328, 112
        %v493 = vsel %vm492, %v489, %v491
        %v494 = vsel %vm492, %v491, %v489
        %s495 = scalar_lea.vmem [#allocation3], 7
        %v496 = vld [vmem:[%s495] ss:$8 sm:$0x3]
        %v498 = vlaneseq
        %v499 = vshrl.u32 %v498, 7
        %v500 = vsub.s32 0, %v499
        %v501 = vrot.slane %v496, %v500
        %v502 = vlaneseq
        %v503 = vshrl.u32 %v502, 7
        %v504 = vsub.s32 1, %v503
        %v505 = vrot.slane %v496, %v504
        %v508 = vmul.f32 %v493, %v501
        %v509 = vmul.f32 %v494, %v505
        %v512 = vrot.slane %v508, 4
        %v513 = vrot.slane %v509, 4
        %516 = vst [vmem:[#allocation2 + $0x30] sm:$0xf0] %v512
        %517 = vst [vmem:[#allocation2 + $0x38] sm:$0xf0] %v513
        %518 = vrot.lane.b32.xlu0 %v319, 111
        %v519 = vpop.permute.xlu0 %518
        %520 = vrot.lane.b32.xlu0 %v321, 111
        %v521 = vpop.permute.xlu0 %520
        %vm522 = vcmp.lt.s32.totalorder %v328, 111
        %v523 = vsel %vm522, %v519, %v521
        %v524 = vsel %vm522, %v521, %v519
        %s525 = scalar_lea.vmem [#allocation3], 16
        %v526 = vld [vmem:[%s525] ss:$8 sm:$0x3]
        %v528 = vlaneseq
        %v529 = vshrl.u32 %v528, 7
        %v530 = vsub.s32 0, %v529
        %v531 = vrot.slane %v526, %v530
        %v532 = vlaneseq
        %v533 = vshrl.u32 %v532, 7
        %v534 = vsub.s32 1, %v533
        %v535 = vrot.slane %v526, %v534
        %v538 = vmul.f32 %v523, %v531
        %v539 = vmul.f32 %v524, %v535
        %540 = vst [vmem:[#allocation2 + $0x40] sm:$0xf] %v538
        %541 = vst [vmem:[#allocation2 + $0x48] sm:$0xf] %v539
        %v542 = vld [vmem:[%s2] sm:$0xf]
        %v543 = vld [vmem:[#allocation2] sm:$0xff]
        %v544 = vld [vmem:[#allocation2 + $0x8] sm:$0xff]
        %v545 = vld [vmem:[#allocation2 + $0x10] sm:$0xff]
        %v546 = vld [vmem:[#allocation2 + $0x18] sm:$0xff]
        %v547 = vld [vmem:[#allocation2 + $0x20] sm:$0xff]
        %v548 = vld [vmem:[#allocation2 + $0x28] sm:$0xff]
        %v549 = vld [vmem:[#allocation2 + $0x30] sm:$0xff]
        %v550 = vld [vmem:[#allocation2 + $0x38] sm:$0xff]
        %v551 = vld [vmem:[#allocation2 + $0x40] sm:$0xf]
        %v552 = vld [vmem:[#allocation2 + $0x48] sm:$0xf]
        %vm553 = vcmask 293888
        %v555 = vsel %vm553, %v542, 0
        %vm557 = vcmask 1043456
        %v559 = vsel %vm557, %v551, 0
        %v562 = vsel %vm557, %v552, 0
        %564 = vmatprep.subr.mxu0 0.0
        %565 = vmatpush1.msra.mxu0 0.0
        %566 = vmatprep.subr.mxu0 0.0
        %567 = vmatpush1.msra.mxu0 0.0
        %568 = vmatprep.subr.mxu0 0.0
        %569 = vmatpush1.msra.mxu0 0.0
        %570 = vmatprep.subr.mxu0 0.0
        %571 = vmatpush1.msra.mxu0 0.0
        %572 = vmatprep.subr.mxu0 0.0
        %573 = vmatpush1.msra.mxu0 0.0
        %574 = vmatprep.subr.mxu0 0.0
        %575 = vmatpush1.msra.mxu0 0.0
        %576 = vmatprep.subr.mxu0 0.0
        %577 = vmatpush1.msra.mxu0 0.0
        %578 = vmatprep.subr.mxu0 0.0
        %579 = vmatpush1.msra.mxu0 0.0
        %580 = vmatprep.subr.mxu0 0.0
        %581 = vmatpush1.msra.mxu0 0.0
        %582 = vmatprep.subr.mxu0 0.0
        %583 = vmatpush1.msra.mxu0 0.0
        %584 = vmatprep.subr.mxu0 0.0
        %585 = vmatpush1.msra.mxu0 0.0
        %586 = vmatprep.subr.mxu0 %v562
        %587 = vmatpush1.msra.mxu0 %v559
        %588 = vmatprep.subr.mxu0 %v550
        %589 = vmatpush1.msra.mxu0 %v549
        %590 = vmatprep.subr.mxu0 %v548
        %591 = vmatpush1.msra.mxu0 %v547
        %592 = vmatprep.subr.mxu0 %v546
        %593 = vmatpush1.msra.mxu0 %v545
        %594 = vmatprep.subr.mxu0 %v544
        %595 = vmatpush1.msra.mxu0 %v543
        %596 = vmatprep.subr.mxu0 0.0
        %597 = vmatpush2.msra.mxu0 0.0
        %598 = vmatprep.subr.mxu0 0.0
        %599 = vmatpush2.msra.mxu0 0.0
        %600 = vmatprep.subr.mxu0 0.0
        %601 = vmatpush2.msra.mxu0 0.0
        %602 = vmatprep.subr.mxu0 0.0
        %603 = vmatpush2.msra.mxu0 0.0
        %604 = vmatprep.subr.mxu0 0.0
        %605 = vmatpush2.msra.mxu0 0.0
        %606 = vmatprep.subr.mxu0 0.0
        %607 = vmatpush2.msra.mxu0 0.0
        %608 = vmatprep.subr.mxu0 0.0
        %609 = vmatpush2.msra.mxu0 0.0
        %610 = vmatprep.subr.mxu0 0.0
        %611 = vmatpush2.msra.mxu0 0.0
        %612 = vmatprep.subr.mxu0 0.0
        %613 = vmatpush2.msra.mxu0 0.0
        %614 = vmatprep.subr.mxu0 0.0
        %615 = vmatpush2.msra.mxu0 0.0
        %616 = vmatprep.subr.mxu0 0.0
        %617 = vmatpush2.msra.mxu0 0.0
        %618 = vmatprep.subr.mxu0 0.0
        %619 = vmatpush2.msra.mxu0 0.0
        %620 = vmatprep.subr.mxu0 0.0
        %621 = vmatpush2.msra.mxu0 0.0
        %622 = vmatprep.subr.mxu0 0.0
        %623 = vmatpush2.msra.mxu0 0.0
        %624 = vmatprep.subr.mxu0 0.0
        %625 = vmatpush2.msra.mxu0 0.0
        %626 = vmatprep.subr.mxu0 0.0
        %627 = vmatpush2.msra.mxu0 0.0
        %628 = vmatprep.mubr.f32.mxu0 0.0
        %629 = vmatmul.mubr.f32.gmra.mxu0 %v555
        %v630 = vpop.f32.mrf.mxu0
        %v631 = vadd.f32 0.0, %v630
        %v632 = vpop.f32.mrf.mxu0
        %v633 = vadd.f32 0.0, %v632
        %634 = vdwg.mxu0
        %v635 = vsel %vm557, %v631, 0.0
        %v636 = vsel %vm557, %v633, 0.0
        %v637 = vadd.f32 %v635, %v636
        %638 = vadd.xlane.f32.xlu0 %v637
        %v639 = vpop.xlane.xlu0 %638
        %v640 = vrcp.pop 256.0
        %v641 = vmul.f32 %v639, %v640
        %v642 = vsub.f32 %v631, %v641
        %v643 = vsub.f32 %v633, %v641
        %v644 = vmul.f32 %v642, %v642
        %v645 = vmul.f32 %v643, %v643
        %v646 = vsel %vm557, %v644, 0.0
        %v647 = vsel %vm557, %v645, 0.0
        %v648 = vadd.f32 %v646, %v647
        %649 = vadd.xlane.f32.xlu0 %v648
        %v650 = vpop.xlane.xlu0 %649
        %v651 = vmul.f32 %v650, %v640
        %v652 = vadd.f32 %v651, 1e-05
        %v653 = vrsqrt.pop %v652
        %v654 = vmul.f32 %v642, %v653
        %v655 = vmul.f32 %v643, %v653
        %v656 = vld [vmem:[%s3] sm:$0xf]
        %658 = vset.pattern.permute.xlu0 0
        %659 = vperm.xlu0 %658, %v656
        %v660 = vpop.permute.xlu0 %659
        %v662 = vmul.f32 %v654, %v660
        %v663 = vmul.f32 %v655, %v660
        %v664 = vld [vmem:[%s4] sm:$0xf]
        %666 = vset.pattern.permute.xlu0 0
        %667 = vperm.xlu0 %666, %v664
        %v668 = vpop.permute.xlu0 %667
        %v670 = vadd.f32 %v662, %v668
        %v671 = vadd.f32 %v663, %v668
        %v672 = vmax.f32 %v670, 0.0
        %v673 = vmax.f32 %v671, 0.0
        %674 = vrot.lane.b32.xlu0 %v672, 17
        %v675 = vpop.permute.xlu0 %674
        %676 = vrot.lane.b32.xlu0 %v673, 17
        %v677 = vpop.permute.xlu0 %676
        %v678 = vsel %vm329, %v675, %v677
        %v679 = vsel %vm329, %v677, %v675
        %v680 = vld [vmem:[#allocation3] ss:$8 sm:$0x3]
        %v682 = vlaneseq
        %v683 = vshrl.u32 %v682, 7
        %v684 = vsub.s32 0, %v683
        %v685 = vrot.slane %v680, %v684
        %v686 = vlaneseq
        %v687 = vshrl.u32 %v686, 7
        %v688 = vsub.s32 1, %v687
        %v689 = vrot.slane %v680, %v688
        %v692 = vmul.f32 %v679, %v685
        %v693 = vmul.f32 %v678, %v689
        %694 = vst [vmem:[#allocation2] sm:$0xf] %v692
        %695 = vst [vmem:[#allocation2 + $0x8] sm:$0xf] %v693
        %696 = vrot.lane.b32.xlu0 %v672, 16
        %v697 = vpop.permute.xlu0 %696
        %698 = vrot.lane.b32.xlu0 %v673, 16
        %v699 = vpop.permute.xlu0 %698
        %v700 = vsel %vm352, %v697, %v699
        %v701 = vsel %vm352, %v699, %v697
        %v702 = vld [vmem:[%s355] ss:$8 sm:$0x3]
        %v704 = vlaneseq
        %v705 = vshrl.u32 %v704, 7
        %v706 = vsub.s32 0, %v705
        %v707 = vrot.slane %v702, %v706
        %v708 = vlaneseq
        %v709 = vshrl.u32 %v708, 7
        %v710 = vsub.s32 1, %v709
        %v711 = vrot.slane %v702, %v710
        %v714 = vmul.f32 %v701, %v707
        %v715 = vmul.f32 %v700, %v711
        %v718 = vrot.slane %v714, 4
        %v719 = vrot.slane %v715, 4
        %722 = vst [vmem:[#allocation2] sm:$0xf0] %v718
        %723 = vst [vmem:[#allocation2 + $0x8] sm:$0xf0] %v719
        %724 = vrot.lane.b32.xlu0 %v672, 15
        %v725 = vpop.permute.xlu0 %724
        %726 = vrot.lane.b32.xlu0 %v673, 15
        %v727 = vpop.permute.xlu0 %726
        %v728 = vsel %vm382, %v725, %v727
        %v729 = vsel %vm382, %v727, %v725
        %v730 = vld [vmem:[%s385] ss:$8 sm:$0x3]
        %v732 = vlaneseq
        %v733 = vshrl.u32 %v732, 7
        %v734 = vsub.s32 0, %v733
        %v735 = vrot.slane %v730, %v734
        %v736 = vlaneseq
        %v737 = vshrl.u32 %v736, 7
        %v738 = vsub.s32 1, %v737
        %v739 = vrot.slane %v730, %v738
        %v742 = vmul.f32 %v729, %v735
        %v743 = vmul.f32 %v728, %v739
        %744 = vst [vmem:[#allocation2 + $0x10] sm:$0xf] %v742
        %745 = vst [vmem:[#allocation2 + $0x18] sm:$0xf] %v743
        %746 = vrot.lane.b32.xlu0 %v672, 1
        %v747 = vpop.permute.xlu0 %746
        %748 = vrot.lane.b32.xlu0 %v673, 1
        %v749 = vpop.permute.xlu0 %748
        %v750 = vsel %vm406, %v747, %v749
        %v751 = vsel %vm406, %v749, %v747
        %v752 = vld [vmem:[%s409] ss:$8 sm:$0x3]
        %v754 = vlaneseq
        %v755 = vshrl.u32 %v754, 7
        %v756 = vsub.s32 0, %v755
        %v757 = vrot.slane %v752, %v756
        %v758 = vlaneseq
        %v759 = vshrl.u32 %v758, 7
        %v760 = vsub.s32 1, %v759
        %v761 = vrot.slane %v752, %v760
        %v764 = vmul.f32 %v751, %v757
        %v765 = vmul.f32 %v750, %v761
        %v768 = vrot.slane %v764, 4
        %v769 = vrot.slane %v765, 4
        %772 = vst [vmem:[#allocation2 + $0x10] sm:$0xf0] %v768
        %773 = vst [vmem:[#allocation2 + $0x18] sm:$0xf0] %v769
        %774 = vst [vmem:[#allocation2 + $0x20] sm:$0xf] %v672
        %775 = vst [vmem:[#allocation2 + $0x28] sm:$0xf] %v673
        %776 = vrot.lane.b32.xlu0 %v672, 127
        %v777 = vpop.permute.xlu0 %776
        %778 = vrot.lane.b32.xlu0 %v673, 127
        %v779 = vpop.permute.xlu0 %778
        %v780 = vsel %vm438, %v777, %v779
        %v781 = vsel %vm438, %v779, %v777
        %v782 = vld [vmem:[%s441] ss:$8 sm:$0x3]
        %v784 = vlaneseq
        %v785 = vshrl.u32 %v784, 7
        %v786 = vsub.s32 0, %v785
        %v787 = vrot.slane %v782, %v786
        %v788 = vlaneseq
        %v789 = vshrl.u32 %v788, 7
        %v790 = vsub.s32 1, %v789
        %v791 = vrot.slane %v782, %v790
        %v794 = vmul.f32 %v780, %v787
        %v795 = vmul.f32 %v781, %v791
        %v798 = vrot.slane %v794, 4
        %v799 = vrot.slane %v795, 4
        %802 = vst [vmem:[#allocation2 + $0x20] sm:$0xf0] %v798
        %803 = vst [vmem:[#allocation2 + $0x28] sm:$0xf0] %v799
        %804 = vrot.lane.b32.xlu0 %v672, 113
        %v805 = vpop.permute.xlu0 %804
        %806 = vrot.lane.b32.xlu0 %v673, 113
        %v807 = vpop.permute.xlu0 %806
        %v808 = vsel %vm468, %v805, %v807
        %v809 = vsel %vm468, %v807, %v805
        %v810 = vld [vmem:[%s471] ss:$8 sm:$0x3]
        %v812 = vlaneseq
        %v813 = vshrl.u32 %v812, 7
        %v814 = vsub.s32 0, %v813
        %v815 = vrot.slane %v810, %v814
        %v816 = vlaneseq
        %v817 = vshrl.u32 %v816, 7
        %v818 = vsub.s32 1, %v817
        %v819 = vrot.slane %v810, %v818
        %v822 = vmul.f32 %v808, %v815
        %v823 = vmul.f32 %v809, %v819
        %824 = vst [vmem:[#allocation2 + $0x30] sm:$0xf] %v822
        %825 = vst [vmem:[#allocation2 + $0x38] sm:$0xf] %v823
        %826 = vrot.lane.b32.xlu0 %v672, 112
        %v827 = vpop.permute.xlu0 %826
        %828 = vrot.lane.b32.xlu0 %v673, 112
        %v829 = vpop.permute.xlu0 %828
        %v830 = vsel %vm492, %v827, %v829
        %v831 = vsel %vm492, %v829, %v827
        %v832 = vld [vmem:[%s495] ss:$8 sm:$0x3]
        %v834 = vlaneseq
        %v835 = vshrl.u32 %v834, 7
        %v836 = vsub.s32 0, %v835
        %v837 = vrot.slane %v832, %v836
        %v838 = vlaneseq
        %v839 = vshrl.u32 %v838, 7
        %v840 = vsub.s32 1, %v839
        %v841 = vrot.slane %v832, %v840
        %v844 = vmul.f32 %v830, %v837
        %v845 = vmul.f32 %v831, %v841
        %v848 = vrot.slane %v844, 4
        %v849 = vrot.slane %v845, 4
        %852 = vst [vmem:[#allocation2 + $0x30] sm:$0xf0] %v848
        %853 = vst [vmem:[#allocation2 + $0x38] sm:$0xf0] %v849
        %854 = vrot.lane.b32.xlu0 %v672, 111
        %v855 = vpop.permute.xlu0 %854
        %856 = vrot.lane.b32.xlu0 %v673, 111
        %v857 = vpop.permute.xlu0 %856
        %v858 = vsel %vm522, %v855, %v857
        %v859 = vsel %vm522, %v857, %v855
        %v860 = vld [vmem:[%s525] ss:$8 sm:$0x3]
        %v862 = vlaneseq
        %v863 = vshrl.u32 %v862, 7
        %v864 = vsub.s32 0, %v863
        %v865 = vrot.slane %v860, %v864
        %v866 = vlaneseq
        %v867 = vshrl.u32 %v866, 7
        %v868 = vsub.s32 1, %v867
        %v869 = vrot.slane %v860, %v868
        %v872 = vmul.f32 %v858, %v865
        %v873 = vmul.f32 %v859, %v869
        %874 = vst [vmem:[#allocation2 + $0x40] sm:$0xf] %v872
        %875 = vst [vmem:[#allocation2 + $0x48] sm:$0xf] %v873
        %v876 = vld [vmem:[%s5] sm:$0xf]
        %v877 = vld [vmem:[#allocation2] sm:$0xff]
        %v878 = vld [vmem:[#allocation2 + $0x8] sm:$0xff]
        %v879 = vld [vmem:[#allocation2 + $0x10] sm:$0xff]
        %v880 = vld [vmem:[#allocation2 + $0x18] sm:$0xff]
        %v881 = vld [vmem:[#allocation2 + $0x20] sm:$0xff]
        %v882 = vld [vmem:[#allocation2 + $0x28] sm:$0xff]
        %v883 = vld [vmem:[#allocation2 + $0x30] sm:$0xff]
        %v884 = vld [vmem:[#allocation2 + $0x38] sm:$0xff]
        %v885 = vld [vmem:[#allocation2 + $0x40] sm:$0xf]
        %v886 = vld [vmem:[#allocation2 + $0x48] sm:$0xf]
        %v888 = vsel %vm553, %v876, 0
        %v891 = vsel %vm557, %v885, 0
        %v894 = vsel %vm557, %v886, 0
        %896 = vmatprep.subr.mxu0 0.0
        %897 = vmatpush1.msra.mxu0 0.0
        %898 = vmatprep.subr.mxu0 0.0
        %899 = vmatpush1.msra.mxu0 0.0
        %900 = vmatprep.subr.mxu0 0.0
        %901 = vmatpush1.msra.mxu0 0.0
        %902 = vmatprep.subr.mxu0 0.0
        %903 = vmatpush1.msra.mxu0 0.0
        %904 = vmatprep.subr.mxu0 0.0
        %905 = vmatpush1.msra.mxu0 0.0
        %906 = vmatprep.subr.mxu0 0.0
        %907 = vmatpush1.msra.mxu0 0.0
        %908 = vmatprep.subr.mxu0 0.0
        %909 = vmatpush1.msra.mxu0 0.0
        %910 = vmatprep.subr.mxu0 0.0
        %911 = vmatpush1.msra.mxu0 0.0
        %912 = vmatprep.subr.mxu0 0.0
        %913 = vmatpush1.msra.mxu0 0.0
        %914 = vmatprep.subr.mxu0 0.0
        %915 = vmatpush1.msra.mxu0 0.0
        %916 = vmatprep.subr.mxu0 0.0
        %917 = vmatpush1.msra.mxu0 0.0
        %918 = vmatprep.subr.mxu0 %v894
        %919 = vmatpush1.msra.mxu0 %v891
        %920 = vmatprep.subr.mxu0 %v884
        %921 = vmatpush1.msra.mxu0 %v883
        %922 = vmatprep.subr.mxu0 %v882
        %923 = vmatpush1.msra.mxu0 %v881
        %924 = vmatprep.subr.mxu0 %v880
        %925 = vmatpush1.msra.mxu0 %v879
        %926 = vmatprep.subr.mxu0 %v878
        %927 = vmatpush1.msra.mxu0 %v877
        %928 = vmatprep.subr.mxu0 0.0
        %929 = vmatpush2.msra.mxu0 0.0
        %930 = vmatprep.subr.mxu0 0.0
        %931 = vmatpush2.msra.mxu0 0.0
        %932 = vmatprep.subr.mxu0 0.0
        %933 = vmatpush2.msra.mxu0 0.0
        %934 = vmatprep.subr.mxu0 0.0
        %935 = vmatpush2.msra.mxu0 0.0
        %936 = vmatprep.subr.mxu0 0.0
        %937 = vmatpush2.msra.mxu0 0.0
        %938 = vmatprep.subr.mxu0 0.0
        %939 = vmatpush2.msra.mxu0 0.0
        %940 = vmatprep.subr.mxu0 0.0
        %941 = vmatpush2.msra.mxu0 0.0
        %942 = vmatprep.subr.mxu0 0.0
        %943 = vmatpush2.msra.mxu0 0.0
        %944 = vmatprep.subr.mxu0 0.0
        %945 = vmatpush2.msra.mxu0 0.0
        %946 = vmatprep.subr.mxu0 0.0
        %947 = vmatpush2.msra.mxu0 0.0
        %948 = vmatprep.subr.mxu0 0.0
        %949 = vmatpush2.msra.mxu0 0.0
        %950 = vmatprep.subr.mxu0 0.0
        %951 = vmatpush2.msra.mxu0 0.0
        %952 = vmatprep.subr.mxu0 0.0
        %953 = vmatpush2.msra.mxu0 0.0
        %954 = vmatprep.subr.mxu0 0.0
        %955 = vmatpush2.msra.mxu0 0.0
        %956 = vmatprep.subr.mxu0 0.0
        %957 = vmatpush2.msra.mxu0 0.0
        %958 = vmatprep.subr.mxu0 0.0
        %959 = vmatpush2.msra.mxu0 0.0
        %960 = vmatprep.mubr.f32.mxu0 0.0
        %961 = vmatmul.mubr.f32.gmra.mxu0 %v888
        %v962 = vpop.f32.mrf.mxu0
        %v963 = vadd.f32 0.0, %v962
        %v964 = vpop.f32.mrf.mxu0
        %v965 = vadd.f32 0.0, %v964
        %966 = vdwg.mxu0
        %v967 = vsel %vm557, %v963, 0.0
        %v968 = vsel %vm557, %v965, 0.0
        %v969 = vadd.f32 %v967, %v968
        %970 = vadd.xlane.f32.xlu0 %v969
        %v971 = vpop.xlane.xlu0 %970
        %v972 = vmul.f32 %v971, %v640
        %v973 = vsub.f32 %v963, %v972
        %v974 = vsub.f32 %v965, %v972
        %v975 = vmul.f32 %v973, %v973
        %v976 = vmul.f32 %v974, %v974
        %v977 = vsel %vm557, %v975, 0.0
        %v978 = vsel %vm557, %v976, 0.0
        %v979 = vadd.f32 %v977, %v978
        %980 = vadd.xlane.f32.xlu0 %v979
        %v981 = vpop.xlane.xlu0 %980
        %v982 = vmul.f32 %v981, %v640
        %v983 = vadd.f32 %v982, 1e-05
        %v984 = vrsqrt.pop %v983
        %v985 = vmul.f32 %v973, %v984
        %v986 = vmul.f32 %v974, %v984
        %v987 = vld [vmem:[%s6] sm:$0xf]
        %989 = vset.pattern.permute.xlu0 0
        %990 = vperm.xlu0 %989, %v987
        %v991 = vpop.permute.xlu0 %990
        %v993 = vmul.f32 %v985, %v991
        %v994 = vmul.f32 %v986, %v991
        %v995 = vld [vmem:[%s7] sm:$0xf]
        %997 = vset.pattern.permute.xlu0 0
        %998 = vperm.xlu0 %997, %v995
        %v999 = vpop.permute.xlu0 %998
        %v1001 = vadd.f32 %v993, %v999
        %v1002 = vadd.f32 %v994, %v999
        %v1005 = vcombine.low %v1001, %v1002
        %v1007 = vadd.f32 %v319, %v1005
        %1008 = vst [vmem:[%s313] sm:$0xff] %v1007
        %s1009 = sand.u32 %s204, 1
        %s1010 = scalar_lea.sflag [#allocation5], %s1009
        %s1011 = sand.u32 %s204, 1
        %s1012 = smul.addr %s1011, 8
        %s1013 = scalar_lea.vmem [#allocation6], %s1012
        // Predicated region
        $region57: #{tpu_custom_call.1} parent=51 // pred_check
          %p1014 = pneg %p214
        $region58: #{tpu_custom_call.1} parent=51 // pred_check_branch
          %1016 = sbr.rel (%p1014) target = $region60
        $region59: #{tpu_custom_call.1} parent=51 // pred_region
          %s1018 = ssub.s32 128, 128
          %1019 = vsyncadd %s1010, %s1018
          %s1020 = smul.addr %s23, 2
          %s1021 = smul.addr %s1020, 64
          %s1022 = scalar_lea.hbm %s8, %s1021
          %s1024 = sshll.u32 %s1013, 4
          %s1025 = int_to_ptr.vmem [resolvable:$true] %s1024
          %1027 = dma.vmem_to_hbm [thread:$0]  %s1025, 128, %s1022, %s1010
        $region60: #{tpu_custom_call.1} parent=51 // pred_fallthru
          _
      $region52: #{tpu_custom_call.1} parent=5 // pred_fallthru
        _
      %p1028 = scmp.le.s32.totalorder 2, %s18
      // Predicated region
      $region61: #{tpu_custom_call.1} parent=5 // pred_check
        %p1029 = pneg %p1028
      $region62: #{tpu_custom_call.1} parent=5 // pred_check_branch
        %1031 = sbr.rel (%p1029) target = $region64
      $region63: #{tpu_custom_call.1} parent=5 // pred_region
        %s1032 = ssub.s32 %s18, 2
        // Predicated region
        $region65: #{tpu_custom_call.1} parent=63 // pred_check
          %p1033 = pneg %p220
        $region66: #{tpu_custom_call.1} parent=63 // pred_check_branch
          %1035 = sbr.rel (%p1033) target = $region68
        $region67: #{tpu_custom_call.1} parent=63 // pred_region
          %s1036 = sand.u32 %s205, 1
          %s1037 = scalar_lea.sflag [#allocation5], %s1036
          %s1038 = sand.u32 %s205, 1
          %s1039 = smul.addr %s1038, 8
          %s1040 = scalar_lea.vmem [#allocation6], %s1039
          %1041 = dma.done %s1037, 128
        $region68: #{tpu_custom_call.1} parent=63 // pred_fallthru
          _
      $region64: #{tpu_custom_call.1} parent=5 // pred_fallthru
        _
    $region6: #{tpu_custom_call.1} parent=1 // loop_footer
      %s22 = sadd.s32 1, %s18
    $region7: #{tpu_custom_call.1} parent=1 // loop_footer_branch
      %17 = sbr.rel target = $region3
    $region8: #{tpu_custom_call.1} parent=1 // loop_exit
      _
    %1042 = vsyncpa [#allocation4], 1
    %s1043 = scalar_lea.sflag [#allocation4], 1
    %1044 = vsyncpa %s1043, 1
    %1045 = vsyncpa [#allocation5], 1
    %s1046 = scalar_lea.sflag [#allocation5], 1
    %1047 = vsyncpa %s1046, 1

</llo_original>
